<compile_context>
chip_gen: v7x
topology: tpu7x:2x2x1
jax: 0.10.0
libtpu: 0.0.40
codegen_flags: <defaults>
</compile_context>

<pallas_src>
import functools

import jax
import jax.numpy as jnp
from jax.experimental import pallas as pl
from jax.experimental.pallas import tpu as pltpu


def _round_up(x, m):
    return ((x + m - 1) // m) * m


def _accumulate_window(src_ref, o_ref, *, kernel_size, start, out_rows):
    """o = mean_k src[start+k : start+k+out_rows, :]  (unrolled, f32 accumulate)."""
    bc = src_ref.shape[-1]
    acc = jnp.zeros((out_rows, bc), jnp.float32)
    for k in range(kernel_size):  # kernel_size is small & static -> unrolled adds
        acc = acc + src_ref[pl.ds(start + k, out_rows), :].astype(jnp.float32)
    o_ref[...] = (acc * (1.0 / kernel_size)).astype(o_ref.dtype)


def _ma_kernel_single(x_ref, o_ref, work_ref, *, kernel_size, pad, out_rows):
    """Whole time axis in one block; grid is over lane tiles only."""
    main = x_ref[...]                                   # (L, TBC)
    l, bc = main.shape
    if pad > 0:
        front8 = _round_up(pad, 8)                      # aligned front region
        w_rows = work_ref.shape[0]
        back_at = ((front8 + l) // 8) * 8               # aligned back region start
        # Replicate-pad regions first (aligned stores); main is written last so
        # it overwrites the overlap of the back region with its own tail rows.
        work_ref[pl.ds(0, front8), :] = jnp.broadcast_to(main[0:1, :], (front8, bc))
        work_ref[pl.ds(back_at, w_rows - back_at), :] = jnp.broadcast_to(
            main[l - 1:, :], (w_rows - back_at, bc))
        work_ref[pl.ds(front8, l), :] = main
        _accumulate_window(work_ref, o_ref, kernel_size=kernel_size,
                           start=front8 - pad, out_rows=out_rows)
    else:
        _accumulate_window(x_ref, o_ref, kernel_size=kernel_size,
                           start=0, out_rows=out_rows)


def _ma_kernel_halo(x_ref, prev_ref, next_ref, o_ref, work_ref, *,
                    kernel_size, pad, right_ext, halo):
    """Time-tiled path: main tile + small prev/next halo blocks."""
    main = x_ref[...]                                   # (TILE_L, TBC)
    tile_l, bc = main.shape
    t = pl.program_id(0)
    n_t = pl.num_programs(0)
    row = jax.lax.broadcasted_iota(jnp.int32, (halo, 1), 0)
    if pad > 0:
        # rows just before this tile; first tile replicates row 0 instead.
        prev_blk = prev_ref[...]
        front = jnp.broadcast_to(main[0:1, :], (halo, bc))
        prev_blk = jnp.where((t == 0) & (row >= halo - pad), front, prev_blk)
        work_ref[pl.ds(0, halo), :] = prev_blk
    if right_ext > 0:
        # rows just after this tile; last tile replicates the final row instead.
        next_blk = next_ref[...]
        back = jnp.broadcast_to(main[tile_l - 1:, :], (halo, bc))
        next_blk = jnp.where((t == n_t - 1) & (row < right_ext), back, next_blk)
        work_ref[pl.ds(halo + tile_l, halo), :] = next_blk
    work_ref[pl.ds(halo, tile_l), :] = main
    _accumulate_window(work_ref, o_ref, kernel_size=kernel_size,
                       start=halo - pad, out_rows=tile_l)


def _pick_lane_tile(bc):
    if bc <= 128 or bc % 128 != 0:
        return bc                       # full extent (allowed even if < 128)
    for cand in (512, 384, 256, 128):
        if bc % cand == 0:
            return cand
    return bc


def _pick_time_tile(l, min_rows, target_rows):
    """Largest multiple of 8 dividing l, <= target_rows and >= min_rows."""
    if l <= target_rows or l % 8 != 0:
        return l                        # single time tile (full extent)
    lo = max(8, _round_up(min_rows, 8))
    cand = (target_rows // 8) * 8
    while cand >= lo:
        if l % cand == 0:
            return cand
        cand -= 8
    return l


def _pick_halo(tile_l, min_rows):
    """Smallest multiple of 8 >= min_rows that divides tile_l."""
    h = max(8, _round_up(min_rows, 8))
    if h >= tile_l:
        return tile_l
    while tile_l % h != 0:
        h += 8
        if h >= tile_l:
            return tile_l
    return h


def moving_avg(x, kernel_size, stride, *, max_time_tile=512):
    """Equivalent of models/Time_Unet.py::moving_avg.forward for x of shape (B, L, C)."""
    b, l, c = x.shape
    assert kernel_size >= 1 and stride >= 1
    pad = (kernel_size - 1) // 2
    right_ext = kernel_size - 1 - pad

    if kernel_size == 1:
        # AvgPool1d(k=1) is the identity; stride just subsamples the time axis.
        return x if stride == 1 else x[:, ::stride]

    l_out_full = l + 2 * pad - kernel_size + 1          # stride-1 output rows
    assert l_out_full >= 1, "sequence too short for this kernel_size"

    bc = b * c
    # Lane-dense layout: time on sublanes, batch*channels on lanes.
    x2 = jnp.transpose(x, (1, 0, 2)).reshape(l, bc)

    tile_bc = _pick_lane_tile(bc)
    n_c = bc // tile_bc
    needed = max(pad, right_ext, 1)
    tile_l = _pick_time_tile(l, needed, max_time_tile)
    n_t = l // tile_l

    if n_t == 1:
        front8 = _round_up(pad, 8)
        w_rows = _round_up(front8 + l + pad, 8)
        kernel = functools.partial(_ma_kernel_single, kernel_size=kernel_size,
                                   pad=pad, out_rows=l_out_full)
        out2 = pl.pallas_call(
            kernel,
            out_shape=jax.ShapeDtypeStruct((l_out_full, bc), x.dtype),
            grid_spec=pltpu.PrefetchScalarGridSpec(
                num_scalar_prefetch=0,
                grid=(n_c,),
                in_specs=[pl.BlockSpec((l, tile_bc), lambda ci: (0, ci))],
                out_specs=pl.BlockSpec((l_out_full, tile_bc), lambda ci: (0, ci)),
                scratch_shapes=[pltpu.VMEM((w_rows, tile_bc), x.dtype)],
            ),
            compiler_params=pltpu.CompilerParams(
                dimension_semantics=("parallel",),
                vmem_limit_bytes=32 * 1024 * 1024,
            ),
        )(x2)
    else:
        halo = _pick_halo(tile_l, needed)
        r = tile_l // halo              # halo blocks per main tile
        n_h = l // halo                 # total halo blocks along time
        w_rows = tile_l + 2 * halo
        kernel = functools.partial(_ma_kernel_halo, kernel_size=kernel_size,
                                   pad=pad, right_ext=right_ext, halo=halo)
        out2 = pl.pallas_call(
            kernel,
            out_shape=jax.ShapeDtypeStruct((l_out_full, bc), x.dtype),
            grid_spec=pltpu.PrefetchScalarGridSpec(
                num_scalar_prefetch=0,
                grid=(n_t, n_c),
                in_specs=[
                    pl.BlockSpec((tile_l, tile_bc), lambda t, ci: (t, ci)),
                    pl.BlockSpec((halo, tile_bc),
                                 lambda t, ci: (jnp.maximum(t * r - 1, 0), ci)),
                    pl.BlockSpec((halo, tile_bc),
                                 lambda t, ci: (jnp.minimum((t + 1) * r, n_h - 1), ci)),
                ],
                out_specs=pl.BlockSpec((tile_l, tile_bc), lambda t, ci: (t, ci)),
                scratch_shapes=[pltpu.VMEM((w_rows, tile_bc), x.dtype)],
            ),
            compiler_params=pltpu.CompilerParams(
                dimension_semantics=("parallel", "parallel"),
                vmem_limit_bytes=32 * 1024 * 1024,
            ),
        )(x2, x2, x2)

    if stride > 1:
        out2 = out2[::stride]
    l_out = out2.shape[0]
    return out2.reshape(l_out, b, c).transpose(1, 0, 2)


def _reference(x, kernel_size, stride):
    pad = (kernel_size - 1) // 2
    if pad > 0:
        front = jnp.repeat(x[:, :1, :], pad, axis=1)
        end = jnp.repeat(x[:, -1:, :], pad, axis=1)
        xp = jnp.concatenate([front, x, end], axis=1)
    else:
        xp = x
    l_out = (x.shape[1] + 2 * pad - kernel_size) // stride + 1
    return jnp.stack(
        [xp[:, j * stride:j * stride + kernel_size, :].mean(axis=1)
         for j in range(l_out)], axis=1)


if __name__ == "__main__":
    key = jax.random.PRNGKey(0)

    # Case 1: typical module configuration (odd kernel, stride 1) -> single-tile path.
    B, L, C = 2, 16, 8
    x = jax.random.normal(key, (B, L, C), dtype=jnp.float32)
    out = jax.block_until_ready(moving_avg(x, kernel_size=5, stride=1))
    ref = _reference(x, 5, 1)
    assert out.shape == ref.shape
    assert jnp.allclose(out, ref, atol=1e-5, rtol=1e-5)

    # Case 2: time-tiled (halo) path on a longer series.
    x2 = jax.random.normal(jax.random.PRNGKey(0), (2, 32, 8), dtype=jnp.float32)
    out2 = jax.block_until_ready(
        moving_avg(x2, kernel_size=5, stride=1, max_time_tile=16))
    ref2 = _reference(x2, 5, 1)
    assert out2.shape == ref2.shape
    assert jnp.allclose(out2, ref2, atol=1e-5, rtol=1e-5)

    # Case 3: even kernel_size + stride > 1.
    out3 = jax.block_until_ready(moving_avg(x, kernel_size=4, stride=2))
    ref3 = _reference(x, 4, 2)
    assert out3.shape == ref3.shape
    assert jnp.allclose(out3, ref3, atol=1e-5, rtol=1e-5)

    print("KERNEL_OK")
</pallas_src>

<mosaic_0001>
module attributes {stable_mosaic.version = 11 : i64} {
  func.func @_ma_kernel_single(%arg0: i32, %arg1: memref<16x16xf32, #tpu.memory_space<vmem>>, %arg2: memref<16x16xf32, #tpu.memory_space<vmem>>, %arg3: memref<32x16xf32, #tpu.memory_space<vmem>>) attributes {dimension_semantics = [#tpu.dimension_semantics<parallel>], iteration_bounds = array<i64: 1>, scalar_prefetch = 0 : i64, scratch_operands = 1 : i64, tpu.core_type = #tpu.core_type<tc>, window_params = [{transform_indices = @transform_0, window_bounds = array<i64: 16, 16>}, {transform_indices = @transform_1, window_bounds = array<i64: 16, 16>}]} {
    %c0 = arith.constant 0 : index
    %c0_0 = arith.constant 0 : index
    %0 = vector.load %arg1[%c0, %c0_0] : memref<16x16xf32, #tpu.memory_space<vmem>>, vector<16x16xf32>
    %1 = vector.extract_strided_slice %0 {offsets = [0, 0], sizes = [1, 16], strides = [1, 1]} : vector<16x16xf32> to vector<1x16xf32>
    %2 = vector.shape_cast %1 : vector<1x16xf32> to vector<1x16xf32>
    %3 = vector.broadcast %2 : vector<1x16xf32> to vector<8x16xf32>
    %c0_1 = arith.constant 0 : index
    %c0_2 = arith.constant 0 : index
    %4 = vector.load %arg3[%c0_1, %c0_2] : memref<32x16xf32, #tpu.memory_space<vmem>>, vector<8x16xf32>
    tpu.vector_store %arg3[%c0_1, %c0_2], %3 {strides = array<i32>} : memref<32x16xf32, #tpu.memory_space<vmem>>, vector<8x16xf32>,
    %5 = vector.extract_strided_slice %0 {offsets = [15, 0], sizes = [1, 16], strides = [1, 1]} : vector<16x16xf32> to vector<1x16xf32>
    %6 = vector.shape_cast %5 : vector<1x16xf32> to vector<1x16xf32>
    %7 = vector.broadcast %6 : vector<1x16xf32> to vector<8x16xf32>
    %c24 = arith.constant 24 : index
    %c0_3 = arith.constant 0 : index
    %8 = vector.load %arg3[%c24, %c0_3] : memref<32x16xf32, #tpu.memory_space<vmem>>, vector<8x16xf32>
    tpu.vector_store %arg3[%c24, %c0_3], %7 {strides = array<i32>} : memref<32x16xf32, #tpu.memory_space<vmem>>, vector<8x16xf32>,
    %c8 = arith.constant 8 : index
    %c0_4 = arith.constant 0 : index
    %9 = vector.load %arg3[%c8, %c0_4] : memref<32x16xf32, #tpu.memory_space<vmem>>, vector<16x16xf32>
    tpu.vector_store %arg3[%c8, %c0_4], %0 {strides = array<i32>} : memref<32x16xf32, #tpu.memory_space<vmem>>, vector<16x16xf32>,
    %cst = arith.constant 0.000000e+00 : f32
    %10 = vector.broadcast %cst : f32 to vector<16x16xf32>
    %c6 = arith.constant 6 : index
    %c0_5 = arith.constant 0 : index
    %11 = vector.load %arg3[%c6, %c0_5] : memref<32x16xf32, #tpu.memory_space<vmem>>, vector<16x16xf32>
    %12 = arith.addf %10, %11 : vector<16x16xf32>
    %c7 = arith.constant 7 : index
    %c0_6 = arith.constant 0 : index
    %13 = vector.load %arg3[%c7, %c0_6] : memref<32x16xf32, #tpu.memory_space<vmem>>, vector<16x16xf32>
    %14 = arith.addf %12, %13 : vector<16x16xf32>
    %c8_7 = arith.constant 8 : index
    %c0_8 = arith.constant 0 : index
    %15 = vector.load %arg3[%c8_7, %c0_8] : memref<32x16xf32, #tpu.memory_space<vmem>>, vector<16x16xf32>
    %16 = arith.addf %14, %15 : vector<16x16xf32>
    %c9 = arith.constant 9 : index
    %c0_9 = arith.constant 0 : index
    %17 = vector.load %arg3[%c9, %c0_9] : memref<32x16xf32, #tpu.memory_space<vmem>>, vector<16x16xf32>
    %18 = arith.addf %16, %17 : vector<16x16xf32>
    %c10 = arith.constant 10 : index
    %c0_10 = arith.constant 0 : index
    %19 = vector.load %arg3[%c10, %c0_10] : memref<32x16xf32, #tpu.memory_space<vmem>>, vector<16x16xf32>
    %20 = arith.addf %18, %19 : vector<16x16xf32>
    %cst_11 = arith.constant 2.000000e-01 : f32
    %21 = vector.broadcast %cst_11 : f32 to vector<16x16xf32>
    %22 = arith.mulf %20, %21 : vector<16x16xf32>
    %c0_12 = arith.constant 0 : index
    %c0_13 = arith.constant 0 : index
    %23 = vector.load %arg2[%c0_12, %c0_13] : memref<16x16xf32, #tpu.memory_space<vmem>>, vector<16x16xf32>
    tpu.vector_store %arg2[%c0_12, %c0_13], %22 {strides = array<i32>} : memref<16x16xf32, #tpu.memory_space<vmem>>, vector<16x16xf32>,
    return
  }
  func.func @transform_0(%arg0: i32) -> (i32, i32) {
    %c0_i32 = arith.constant 0 : i32
    %c0_i32_0 = arith.constant 0 : i32
    return %c0_i32, %arg0 : i32, i32
  }
  func.func @transform_1(%arg0: i32) -> (i32, i32) {
    %c0_i32 = arith.constant 0 : i32
    %c0_i32_0 = arith.constant 0 : i32
    return %c0_i32, %arg0 : i32, i32
  }
}

</mosaic_0001>

<llo_original>
// kernel: tpu_custom_call.1
$region0: #{tpu_custom_call.1}
  #allocation0 [shape = 'u32[]', space=smem, size = 0x4, offset = 0x4, fixed_abs, tag = 'smem constant byte address 0x4 - core index']
  #allocation1 [shape = 'u32[144,128]{1,0:T(1,128)}', space=vmem, size = 0x12000, scoped, tag = 'internal scratch']
  #allocation2 [shape = 'f32[32,16]{1,0:T(8,128)}', space=vmem, size = 0x4000, scoped, tag = 'scratch operand']
  %s0 = inlined_call_operand.hbm [shape: f32[16,16], index: 0, kind: input, shape index: {}]
  %s1 = inlined_call_operand.hbm [shape: f32[16,16], index: 1, kind: output, shape index: {}]
  %s2 = sld [smem:[#allocation0]]
  $region18: #{tpu_custom_call.1} parent=0
    _
  %s4 = ssub.s32 1, %s2
  %s5 = scalar_select 0, %s4, %s2
  $region1: #{tpu_custom_call.1} parent=0
    #allocation3 [shape = 'u8[8192]{0}', space=vmem, size = 0x2000, scoped, tag = 'input window, operand 0, single buffered']
    #allocation4 [shape = 's32[1]{0}', space=sflag, size = 0x4, scoped, tag = 'scoped memory for tpu_custom_call.1']
    #allocation5 [shape = 's32[1]{0}', space=sflag, size = 0x4, scoped, tag = 'scoped memory for tpu_custom_call.1']
    #allocation6 [shape = 'u8[8192]{0}', space=vmem, size = 0x2000, scoped, tag = 'output window, operand 0, single buffered']
    %6 = vsyncpa [#allocation4], 0
    %7 = vsyncpa [#allocation5], 0
    // Predicated region
    $region2: #{tpu_custom_call.1} parent=1 // pred_check
      _
    $region3: #{tpu_custom_call.1} parent=1 // pred_check_branch
      %9 = sbr.rel (0) target = $region5
    $region4: #{tpu_custom_call.1} parent=1 // pred_region
      %s11 = ssub.s32 256, 256
      %12 = vsyncadd [#allocation4], %s11
      %s13 = sshll.u32 [#allocation3], 4
      %s14 = int_to_ptr.vmem [resolvable:$true] %s13
      %19 = dma.hbm_to_vmem [thread:$0]  %s0, 256, %s14, [#allocation4], 128, 128, 8
    $region5: #{tpu_custom_call.1} parent=1 // pred_fallthru
      _
    // Predicated region
    $region6: #{tpu_custom_call.1} parent=1 // pred_check
      _
    $region7: #{tpu_custom_call.1} parent=1 // pred_check_branch
      %21 = sbr.rel (0) target = $region9
    $region8: #{tpu_custom_call.1} parent=1 // pred_region
      %22 = dma.done [#allocation4], 256
    $region9: #{tpu_custom_call.1} parent=1 // pred_fallthru
      _
    %v23 = vld [vmem:[#allocation3] sm:$0xff]
    %v24 = vld [vmem:[#allocation3 + $0x8] sm:$0xff]
    %v25 = vlaneseq
    %v26 = vshrl.u32 %v25, 7
    %v27 = vsub.s32 0, %v26
    %v28 = vrot.slane %v23, %v27
    %vm29 = vcmask 130048
    %30 = vst.msk [vmem:[#allocation2] sm:$0xff] %vm29, %v28
    %v31 = vlaneseq
    %v32 = vshrl.u32 %v31, 7
    %v33 = vsub.s32 7, %v32
    %v34 = vrot.slane %v24, %v33
    %35 = vst.msk [vmem:[#allocation2 + $0x18] sm:$0xff] %vm29, %v34
    %36 = vst.msk [vmem:[#allocation2 + $0x8] sm:$0xff] %vm29, %v23
    %37 = vst.msk [vmem:[#allocation2 + $0x10] sm:$0xff] %vm29, %v24
    %v38 = vld [vmem:[#allocation2 + $0x6] sm:$0xff]
    %v39 = vld [vmem:[#allocation2 + $0xe] sm:$0xff]
    %v40 = vadd.f32 %v38, 0.0
    %v41 = vadd.f32 %v39, 0.0
    %v42 = vld [vmem:[#allocation2 + $0x7] sm:$0xff]
    %v43 = vld [vmem:[#allocation2 + $0xf] sm:$0xff]
    %v44 = vadd.f32 %v40, %v42
    %v45 = vadd.f32 %v41, %v43
    %v46 = vld [vmem:[#allocation2 + $0x8] sm:$0xff]
    %v47 = vld [vmem:[#allocation2 + $0x10] sm:$0xff]
    %v48 = vadd.f32 %v44, %v46
    %v49 = vadd.f32 %v45, %v47
    %v50 = vld [vmem:[#allocation2 + $0x9] sm:$0xff]
    %v51 = vld [vmem:[#allocation2 + $0x11] sm:$0xff]
    %v52 = vadd.f32 %v48, %v50
    %v53 = vadd.f32 %v49, %v51
    %v54 = vld [vmem:[#allocation2 + $0xa] sm:$0xff]
    %v55 = vld [vmem:[#allocation2 + $0x12] sm:$0xff]
    %v56 = vadd.f32 %v52, %v54
    %v57 = vadd.f32 %v53, %v55
    %v58 = vmul.f32 %v56, 0.2
    %v59 = vmul.f32 %v57, 0.2
    %60 = vst.msk [vmem:[#allocation6] sm:$0xff] %vm29, %v58
    %61 = vst.msk [vmem:[#allocation6 + $0x8] sm:$0xff] %vm29, %v59
    // Predicated region
    $region10: #{tpu_custom_call.1} parent=1 // pred_check
      _
    $region11: #{tpu_custom_call.1} parent=1 // pred_check_branch
      %63 = sbr.rel (0) target = $region13
    $region12: #{tpu_custom_call.1} parent=1 // pred_region
      %s65 = ssub.s32 256, 256
      %66 = vsyncadd [#allocation5], %s65
      %s67 = sshll.u32 [#allocation6], 4
      %s68 = int_to_ptr.vmem [resolvable:$true] %s67
      %73 = dma.vmem_to_hbm [thread:$0]  %s68, 256, %s1, [#allocation5], 128, 128, 8
    $region13: #{tpu_custom_call.1} parent=1 // pred_fallthru
      _
    // Predicated region
    $region14: #{tpu_custom_call.1} parent=1 // pred_check
      _
    $region15: #{tpu_custom_call.1} parent=1 // pred_check_branch
      %75 = sbr.rel (0) target = $region17
    $region16: #{tpu_custom_call.1} parent=1 // pred_region
      %76 = dma.done [#allocation5], 256
    $region17: #{tpu_custom_call.1} parent=1 // pred_fallthru
      _
    %77 = vsyncpa [#allocation4], 1
    %78 = vsyncpa [#allocation5], 1

</llo_original>
